<compile_context>
chip_gen: v5e
topology: v5e:2x2
jax: 0.10.0
libtpu: 0.0.40
codegen_flags: <defaults>
</compile_context>

<pallas_src>
import jax
import jax.numpy as jnp
import numpy as np
from jax.experimental import pallas as pl
from jax.experimental.pallas import tpu as pltpu


def _round_up(x, m):
    return ((x + m - 1) // m) * m


def _device_kind():
    try:
        return jax.devices()[0].device_kind.lower()
    except Exception:
        return ""


def _is_low_precision(dtype):
    try:
        return jnp.finfo(dtype).bits <= 16
    except Exception:
        return False


def _default_fold(compute_dtype):
    # Fold F edges into one lane-dense row (C_out * F >= 128 lanes).
    # F=8 (256 lanes) only pays off with bf16 MXU operands on v6e/v7x; with
    # f32 matmuls (or on v5e) F=4 keeps the block-diag FLOP inflation low
    # while still giving an unmasked 128-lane store.
    kind = _device_kind()
    if ("v6" in kind or "v7" in kind) and _is_low_precision(compute_dtype):
        return 8
    return 4


def _max_rows_for_vmem(c_in, c_out, F, x_bytes, w_bytes, out_bytes, budget_bytes):
    """Largest rows-per-block (multiple of 8) whose double-buffered blocks plus
    f32 kernel intermediates fit in `budget_bytes` of VMEM."""
    lane_in, lane_out = c_in * F, c_out * F
    per_row = (2 * lane_in * x_bytes       # double-buffered input block
               + 2 * lane_out * out_bytes  # double-buffered output block
               + lane_in * w_bytes         # x cast to MXU dtype
               + 2 * lane_out * 4          # h (f32) and y (f32) intermediates
               + lane_out * w_bytes)       # h cast to MXU dtype
    fixed = 2 * w_bytes * lane_out * (lane_in + lane_out) + 4 * 4 * lane_out
    avail = max(budget_bytes - fixed, per_row * 8)
    return max(8, (avail // per_row) // 8 * 8)


def prepare_edgecnn_params(w1, b1, w2, b2, *, fold=None, compute_dtype=jnp.bfloat16):
    """Build the folded (block-diagonal) weights ONCE at module init.

    w1: [C_out, C_in, 1], b1: [C_out], w2: [C_out, C_out, 1], b2: [C_out].
    compute_dtype: MXU operand dtype (bf16 recommended; accumulation is f32).
    """
    c_out, c_in, k = w1.shape
    assert k == 1, "EdgeCNN uses kernel_size=1 convolutions"
    F = _default_fold(compute_dtype) if fold is None else fold

    w1_t = jnp.transpose(w1[:, :, 0]).astype(jnp.float32)   # [C_in, C_out]
    w2_t = jnp.transpose(w2[:, :, 0]).astype(jnp.float32)   # [C_out, C_out]
    eye = jnp.eye(F, dtype=jnp.float32)
    return dict(
        fold=F, c_in=c_in, c_out=c_out,
        # block-diagonal fold: [C_in*F, C_out*F] / [C_out*F, C_out*F]
        w1_bd=jnp.kron(eye, w1_t).astype(compute_dtype),
        w2_bd=jnp.kron(eye, w2_t).astype(compute_dtype),
        b1_bd=jnp.tile(b1.astype(jnp.float32), F).reshape(1, c_out * F),
        b2_bd=jnp.tile(b2.astype(jnp.float32), F).reshape(1, c_out * F),
        # unfolded weights (same MXU dtype) for the <F-edge tail path
        w1_t=w1_t.astype(compute_dtype),
        w2_t=w2_t.astype(compute_dtype),
        b1=b1.astype(jnp.float32),
        b2=b2.astype(jnp.float32),
    )


def edgecnn_kernel(x_ref, w1_ref, b1_ref, w2_ref, b2_ref, o_ref):
    # x_ref:  (R_blk, C_in*F)    folded block of edges (F edges per row)
    # w1_ref: (C_in*F, C_out*F)  block-diag conv1 weight (MXU operand dtype)
    # b1_ref: (1, C_out*F)       f32
    # w2_ref: (C_out*F, C_out*F) block-diag conv2 weight
    # b2_ref: (1, C_out*F)       f32
    # o_ref:  (R_blk, C_out*F)   lane-dense output block
    w1 = w1_ref[...]
    w2 = w2_ref[...]
    x = x_ref[...].astype(w1.dtype)                       # MXU operands (bf16/f32)
    h = jnp.dot(x, w1, preferred_element_type=jnp.float32) + b1_ref[...]
    h = jax.nn.sigmoid(h)                                 # f32 on the VPU/EUP
    y = jnp.dot(h.astype(w2.dtype), w2,
                preferred_element_type=jnp.float32) + b2_ref[...]
    o_ref[...] = y.astype(o_ref.dtype)


def _tail_forward(x_tail, params, out_dtype):
    # <F leftover edges: plain JAX with the same operand precision as the kernel.
    x = x_tail.astype(params["w1_t"].dtype)
    h = jnp.dot(x, params["w1_t"], preferred_element_type=jnp.float32) + params["b1"]
    h = jax.nn.sigmoid(h)
    y = jnp.dot(h.astype(params["w2_t"].dtype), params["w2_t"],
                preferred_element_type=jnp.float32) + params["b2"]
    return y.astype(out_dtype)


def edge_cnn_forward(edge_attr, params, *, tile_e=32768, out_dtype=None):
    """EdgeCNN forward: y = sigmoid(x @ W1^T + b1) @ W2^T + b2.

    edge_attr: [E, C_in]; params from prepare_edgecnn_params(); returns [E, C_out].
    The kernel is HBM-bound and the output is ~8/9 of the traffic: pass
    out_dtype=jnp.bfloat16 to nearly halve HBM bytes if downstream tolerates it.
    """
    if edge_attr is None:
        return None
    E, c_in = edge_attr.shape
    assert c_in == params["c_in"]
    F, c_out = params["fold"], params["c_out"]
    out_dtype = edge_attr.dtype if out_dtype is None else out_dtype

    if E == 0:
        return jnp.zeros((0, c_out), out_dtype)

    kind = _device_kind()
    is_v7 = "v7" in kind
    vmem_limit = (48 << 20) if is_v7 else (64 << 20)   # v7x: 64 MiB physical
    vmem_budget = (28 << 20) if is_v7 else (40 << 20)
    num_cores = 2 if is_v7 else 1

    E_main = (E // F) * F
    rows = E_main // F
    pieces = []

    if rows > 0:
        # Row-major fold [E_main, C_in] -> [rows, C_in*F]: free bitcast, no pad.
        x = edge_attr[:E_main].reshape(rows, c_in * F)

        # Large edge tiles amortize per-grid-step overhead; multiple of 8 for
        # the (8,128) sublane rule; clamp by the VMEM budget; ensure >= 2
        # blocks on dual-TensorCore chips so both cores get work.
        rpb = max(8, _round_up(min(tile_e // F, rows), 8))
        if num_cores > 1 and rows > 8:
            rpb = min(rpb, _round_up(pl.cdiv(rows, num_cores), 8))
        rpb = min(rpb, _max_rows_for_vmem(
            c_in, c_out, F,
            x_bytes=edge_attr.dtype.itemsize,
            w_bytes=params["w1_bd"].dtype.itemsize,
            out_bytes=np.dtype(out_dtype).itemsize,
            budget_bytes=vmem_budget))
        nblk = pl.cdiv(rows, rpb)
        out_rows = nblk * rpb   # output sized to the grid: no OOB writes

        out = pl.pallas_call(
            edgecnn_kernel,
            out_shape=jax.ShapeDtypeStruct((out_rows, c_out * F), out_dtype),
            grid_spec=pltpu.PrefetchScalarGridSpec(
                num_scalar_prefetch=0,
                grid=(nblk,),
                in_specs=[
                    pl.BlockSpec((rpb, c_in * F), lambda i: (i, 0)),          # x
                    pl.BlockSpec((c_in * F, c_out * F), lambda i: (0, 0)),    # W1 bd
                    pl.BlockSpec((1, c_out * F), lambda i: (0, 0)),           # b1
                    pl.BlockSpec((c_out * F, c_out * F), lambda i: (0, 0)),   # W2 bd
                    pl.BlockSpec((1, c_out * F), lambda i: (0, 0)),           # b2
                ],
                out_specs=pl.BlockSpec((rpb, c_out * F), lambda i: (i, 0)),
            ),
            compiler_params=pltpu.CompilerParams(
                dimension_semantics=("parallel",),
                vmem_limit_bytes=vmem_limit,
            ),
        )(x, params["w1_bd"], params["b1_bd"], params["w2_bd"], params["b2_bd"])

        # Unfold (free bitcast); drop clipped-last-block garbage rows.
        pieces.append(out.reshape(out_rows * F, c_out)[:E_main])

    if E_main < E:
        # <F tail edges handled in plain JAX (tiny) -> no whole-array input pad.
        # TODO(synk): for very large E with E % F != 0 the concat below copies
        # the output stream once; a BoundedSlice tail block would avoid it.
        pieces.append(_tail_forward(edge_attr[E_main:], params, out_dtype))

    return pieces[0] if len(pieces) == 1 else jnp.concatenate(pieces, axis=0)


def reference_forward(edge_attr, w1, b1, w2, b2):
    # Pure-JAX f32 reference mirroring the PyTorch module exactly.
    x = edge_attr.astype(jnp.float32)                                  # [E, C_in]
    h = jax.nn.sigmoid(
        jnp.dot(x, w1[:, :, 0].T, preferred_element_type=jnp.float32) + b1)
    y = jnp.dot(h, w2[:, :, 0].T, preferred_element_type=jnp.float32) + b2
    return y                                                           # [E, C_out]


if __name__ == "__main__":
    in_channels = 4
    out_channels = 32
    num_edges = 203   # deliberately NOT a multiple of the fold -> exercises tail

    key = jax.random.PRNGKey(0)
    k_x, k_w1, k_b1, k_w2, k_b2 = jax.random.split(key, 5)

    # Deterministic synthetic parameters (Conv1d weight shape: [out, in, k=1]).
    edge_attr = jax.random.normal(k_x, (num_edges, in_channels), jnp.float32)
    w1 = jax.random.normal(k_w1, (out_channels, in_channels, 1), jnp.float32) * 0.1
    b1 = jax.random.normal(k_b1, (out_channels,), jnp.float32) * 0.1
    w2 = jax.random.normal(k_w2, (out_channels, out_channels, 1), jnp.float32) * 0.1
    b2 = jax.random.normal(k_b2, (out_channels,), jnp.float32) * 0.1

    ref = reference_forward(edge_attr, w1, b1, w2, b2)

    # ---- exact-precision path: f32 MXU operands, f32 output -----------------
    params_f32 = prepare_edgecnn_params(w1, b1, w2, b2, compute_dtype=jnp.float32)
    out_f32 = jax.block_until_ready(
        edge_cnn_forward(edge_attr, params_f32, out_dtype=jnp.float32))
    assert out_f32.shape == (num_edges, out_channels), out_f32.shape
    assert jnp.allclose(out_f32, ref, atol=1e-5, rtol=1e-5), "f32 mismatch vs reference"

    # ---- fast path (default prep): bf16 MXU operands + bf16 output ----------
    params_bf16 = prepare_edgecnn_params(w1, b1, w2, b2)   # compute_dtype=bf16
    out_bf16 = jax.block_until_ready(
        edge_cnn_forward(edge_attr, params_bf16, out_dtype=jnp.bfloat16))
    assert out_bf16.shape == (num_edges, out_channels), out_bf16.shape
    assert jnp.allclose(out_bf16.astype(jnp.float32), ref, atol=5e-2, rtol=5e-2), \
        "bf16 mismatch vs reference"

    print("KERNEL_OK")
</pallas_src>

<mosaic_0001>
module attributes {stable_mosaic.version = 11 : i64} {
  func.func @edgecnn_kernel(%arg0: i32, %arg1: memref<56x16xf32, #tpu.memory_space<vmem>>, %arg2: memref<16x128xf32, #tpu.memory_space<vmem>>, %arg3: memref<1x128xf32, #tpu.memory_space<vmem>>, %arg4: memref<128x128xf32, #tpu.memory_space<vmem>>, %arg5: memref<1x128xf32, #tpu.memory_space<vmem>>, %arg6: memref<56x128xf32, #tpu.memory_space<vmem>>) attributes {dimension_semantics = [#tpu.dimension_semantics<parallel>], iteration_bounds = array<i64: 1>, scalar_prefetch = 0 : i64, scratch_operands = 0 : i64, tpu.core_type = #tpu.core_type<tc>, window_params = [{transform_indices = @transform_0, window_bounds = array<i64: 56, 16>}, {pipeline_mode = #tpu.pipeline_mode<synchronous>, transform_indices = @transform_1, window_bounds = array<i64: 16, 128>}, {pipeline_mode = #tpu.pipeline_mode<synchronous>, transform_indices = @transform_2, window_bounds = array<i64: 1, 128>}, {pipeline_mode = #tpu.pipeline_mode<synchronous>, transform_indices = @transform_3, window_bounds = array<i64: 128, 128>}, {pipeline_mode = #tpu.pipeline_mode<synchronous>, transform_indices = @transform_4, window_bounds = array<i64: 1, 128>}, {transform_indices = @transform_5, window_bounds = array<i64: 56, 128>}]} {
    %c0 = arith.constant 0 : index
    %c0_0 = arith.constant 0 : index
    %0 = vector.load %arg2[%c0, %c0_0] : memref<16x128xf32, #tpu.memory_space<vmem>>, vector<16x128xf32>
    %c0_1 = arith.constant 0 : index
    %c0_2 = arith.constant 0 : index
    %1 = vector.load %arg4[%c0_1, %c0_2] : memref<128x128xf32, #tpu.memory_space<vmem>>, vector<128x128xf32>
    %c0_3 = arith.constant 0 : index
    %c0_4 = arith.constant 0 : index
    %2 = vector.load %arg1[%c0_3, %c0_4] : memref<56x16xf32, #tpu.memory_space<vmem>>, vector<56x16xf32>
    %cst = arith.constant dense<0.000000e+00> : vector<56x128xf32>
    %3 = tpu.matmul %2, %0, %cst {dimension_numbers = #tpu.dot_dimension_numbers<[1], [0], [0], [1], [0, 0, 1, 1], [], []>} : vector<56x16xf32>, vector<16x128xf32>, vector<56x128xf32> -> vector<56x128xf32>
    %c0_5 = arith.constant 0 : index
    %c0_6 = arith.constant 0 : index
    %4 = vector.load %arg3[%c0_5, %c0_6] : memref<1x128xf32, #tpu.memory_space<vmem>>, vector<1x128xf32>
    %5 = vector.broadcast %4 : vector<1x128xf32> to vector<56x128xf32>
    %6 = arith.addf %3, %5 : vector<56x128xf32>
    %7 = arith.negf %6 : vector<56x128xf32>
    %8 = math.exp %7 : vector<56x128xf32>
    %cst_7 = arith.constant 1.000000e+00 : f32
    %9 = vector.broadcast %cst_7 : f32 to vector<56x128xf32>
    %10 = arith.addf %9, %8 : vector<56x128xf32>
    %11 = arith.divf %9, %10 : vector<56x128xf32>
    %cst_8 = arith.constant dense<0.000000e+00> : vector<56x128xf32>
    %12 = tpu.matmul %11, %1, %cst_8 {dimension_numbers = #tpu.dot_dimension_numbers<[1], [0], [0], [1], [0, 0, 1, 1], [], []>} : vector<56x128xf32>, vector<128x128xf32>, vector<56x128xf32> -> vector<56x128xf32>
    %c0_9 = arith.constant 0 : index
    %c0_10 = arith.constant 0 : index
    %13 = vector.load %arg5[%c0_9, %c0_10] : memref<1x128xf32, #tpu.memory_space<vmem>>, vector<1x128xf32>
    %14 = vector.broadcast %13 : vector<1x128xf32> to vector<56x128xf32>
    %15 = arith.addf %12, %14 : vector<56x128xf32>
    %c0_11 = arith.constant 0 : index
    %c0_12 = arith.constant 0 : index
    %16 = vector.load %arg6[%c0_11, %c0_12] : memref<56x128xf32, #tpu.memory_space<vmem>>, vector<56x128xf32>
    tpu.vector_store %arg6[%c0_11, %c0_12], %15 {strides = array<i32>} : memref<56x128xf32, #tpu.memory_space<vmem>>, vector<56x128xf32>,
    return
  }
  func.func @transform_0(%arg0: i32) -> (i32, i32) {
    %c0_i32 = arith.constant 0 : i32
    %c0_i32_0 = arith.constant 0 : i32
    return %arg0, %c0_i32 : i32, i32
  }
  func.func @transform_1(%arg0: i32) -> (i32, i32) {
    %c0_i32 = arith.constant 0 : i32
    %c0_i32_0 = arith.constant 0 : i32
    %c0_i32_1 = arith.constant 0 : i32
    return %c0_i32, %c0_i32_0 : i32, i32
  }
  func.func @transform_2(%arg0: i32) -> (i32, i32) {
    %c0_i32 = arith.constant 0 : i32
    %c0_i32_0 = arith.constant 0 : i32
    %c0_i32_1 = arith.constant 0 : i32
    return %c0_i32, %c0_i32_0 : i32, i32
  }
  func.func @transform_3(%arg0: i32) -> (i32, i32) {
    %c0_i32 = arith.constant 0 : i32
    %c0_i32_0 = arith.constant 0 : i32
    %c0_i32_1 = arith.constant 0 : i32
    return %c0_i32, %c0_i32_0 : i32, i32
  }
  func.func @transform_4(%arg0: i32) -> (i32, i32) {
    %c0_i32 = arith.constant 0 : i32
    %c0_i32_0 = arith.constant 0 : i32
    %c0_i32_1 = arith.constant 0 : i32
    return %c0_i32, %c0_i32_0 : i32, i32
  }
  func.func @transform_5(%arg0: i32) -> (i32, i32) {
    %c0_i32 = arith.constant 0 : i32
    %c0_i32_0 = arith.constant 0 : i32
    return %arg0, %c0_i32 : i32, i32
  }
}

</mosaic_0001>

<llo_original>
// kernel: tpu_custom_call.1
$region0: #{tpu_custom_call.1}
  #allocation0 [shape = 'u32[]', space=smem, size = 0x4, offset = 0x4, fixed_abs, tag = 'smem constant byte address 0x4 - core index']
  #allocation1 [shape = 'u32[72,128]{1,0:T(1,128)}', space=vmem, size = 0x9000, scoped, tag = 'internal scratch']
  %s0 = inlined_call_operand.vmem [shape: f32[50,16], index: 0, kind: input, shape index: {}]
  %s1 = inlined_call_operand.vmem [shape: f32[16,128], index: 1, kind: input, shape index: {}]
  %s2 = inlined_call_operand.vmem [shape: f32[1,128], index: 2, kind: input, shape index: {}]
  %s3 = inlined_call_operand.hbm [shape: f32[128,128], index: 3, kind: input, shape index: {}]
  %s4 = inlined_call_operand.vmem [shape: f32[1,128], index: 4, kind: input, shape index: {}]
  %s5 = inlined_call_operand.hbm [shape: f32[56,128], index: 5, kind: output, shape index: {}]
  %s6 = sld [smem:[#allocation0]]
  $region34: #{tpu_custom_call.1} parent=0
    _
  %s8 = ssub.s32 1, %s6
  %s9 = scalar_select 0, %s8, %s6
  $region1: #{tpu_custom_call.1} parent=0
    #allocation2 [shape = 'u8[65536]{0}', space=vmem, size = 0x10000, scoped, tag = 'input window, operand 3, single buffered']
    #allocation3 [shape = 's32[1]{0}', space=sflag, size = 0x4, scoped, tag = 'scoped memory for tpu_custom_call.1']
    #allocation4 [shape = 's32[1]{0}', space=sflag, size = 0x4, scoped, tag = 'scoped memory for tpu_custom_call.1']
    #allocation5 [shape = 'u8[28672]{0}', space=vmem, size = 0x7000, scoped, tag = 'output window, operand 0, single buffered']
    %10 = vsyncpa [#allocation3], 0
    %11 = vsyncpa [#allocation4], 0
    // Predicated region
    $region2: #{tpu_custom_call.1} parent=1 // pred_check
      _
    $region3: #{tpu_custom_call.1} parent=1 // pred_check_branch
      %13 = sbr.rel (0) target = $region5
    $region4: #{tpu_custom_call.1} parent=1 // pred_region
      _
    $region5: #{tpu_custom_call.1} parent=1 // pred_fallthru
      _
    // Predicated region
    $region6: #{tpu_custom_call.1} parent=1 // pred_check
      _
    $region7: #{tpu_custom_call.1} parent=1 // pred_check_branch
      %15 = sbr.rel (0) target = $region9
    $region8: #{tpu_custom_call.1} parent=1 // pred_region
      _
    $region9: #{tpu_custom_call.1} parent=1 // pred_fallthru
      _
    // Predicated region
    $region10: #{tpu_custom_call.1} parent=1 // pred_check
      _
    $region11: #{tpu_custom_call.1} parent=1 // pred_check_branch
      %17 = sbr.rel (0) target = $region13
    $region12: #{tpu_custom_call.1} parent=1 // pred_region
      _
    $region13: #{tpu_custom_call.1} parent=1 // pred_fallthru
      _
    // Predicated region
    $region14: #{tpu_custom_call.1} parent=1 // pred_check
      _
    $region15: #{tpu_custom_call.1} parent=1 // pred_check_branch
      %19 = sbr.rel (0) target = $region17
    $region16: #{tpu_custom_call.1} parent=1 // pred_region
      %21 = vsyncadd [#allocation3], 0
      %s22 = sshll.u32 %s3, 4
      %s23 = int_to_ptr.hbm [resolvable:$true] %s22
      %s24 = sshll.u32 [#allocation2], 4
      %s25 = int_to_ptr.vmem [resolvable:$true] %s24
      %30 = dma.hbm_to_vmem [thread:$0]  %s23, 2048, %s25, [#allocation3], 128, 128, 8
    $region17: #{tpu_custom_call.1} parent=1 // pred_fallthru
      _
    // Predicated region
    $region18: #{tpu_custom_call.1} parent=1 // pred_check
      _
    $region19: #{tpu_custom_call.1} parent=1 // pred_check_branch
      %32 = sbr.rel (0) target = $region21
    $region20: #{tpu_custom_call.1} parent=1 // pred_region
      _
    $region21: #{tpu_custom_call.1} parent=1 // pred_fallthru
      _
    // Predicated region
    $region22: #{tpu_custom_call.1} parent=1 // pred_check
      _
    $region23: #{tpu_custom_call.1} parent=1 // pred_check_branch
      %34 = sbr.rel (0) target = $region25
    $region24: #{tpu_custom_call.1} parent=1 // pred_region
      %36 = dma.done [#allocation3], 2048
    $region25: #{tpu_custom_call.1} parent=1 // pred_fallthru
      _
    %v37 = vld [vmem:[%s1] sm:$0xff]
    %v38 = vld [vmem:[%s1 + $0x8] sm:$0xff]
    %v39 = vld [vmem:[#allocation2] sm:$0xff]
    %v40 = vld [vmem:[#allocation2 + $0x8] sm:$0xff]
    %v41 = vld [vmem:[#allocation2 + $0x10] sm:$0xff]
    %v42 = vld [vmem:[#allocation2 + $0x18] sm:$0xff]
    %v43 = vld [vmem:[#allocation2 + $0x20] sm:$0xff]
    %v44 = vld [vmem:[#allocation2 + $0x28] sm:$0xff]
    %v45 = vld [vmem:[#allocation2 + $0x30] sm:$0xff]
    %v46 = vld [vmem:[#allocation2 + $0x38] sm:$0xff]
    %v47 = vld [vmem:[#allocation2 + $0x40] sm:$0xff]
    %v48 = vld [vmem:[#allocation2 + $0x48] sm:$0xff]
    %v49 = vld [vmem:[#allocation2 + $0x50] sm:$0xff]
    %v50 = vld [vmem:[#allocation2 + $0x58] sm:$0xff]
    %v51 = vld [vmem:[#allocation2 + $0x60] sm:$0xff]
    %v52 = vld [vmem:[#allocation2 + $0x68] sm:$0xff]
    %v53 = vld [vmem:[#allocation2 + $0x70] sm:$0xff]
    %v54 = vld [vmem:[#allocation2 + $0x78] sm:$0xff]
    %v55 = vld [vmem:[%s0] sm:$0xff]
    %v56 = vld [vmem:[%s0 + $0x8] sm:$0xff]
    %v57 = vld [vmem:[%s0 + $0x10] sm:$0xff]
    %v58 = vld [vmem:[%s0 + $0x18] sm:$0xff]
    %v59 = vld [vmem:[%s0 + $0x20] sm:$0xff]
    %v60 = vld [vmem:[%s0 + $0x28] sm:$0xff]
    %v61 = vld [vmem:[%s0 + $0x30] sm:$0xff]
    %v62 = vld [vmem:[%s2] sm:$0x1]
    %v64 = vperm.slane %v62, 0
    %vm66 = vcmask 130048
    %v68 = vsel %vm66, %v55, 0
    %v71 = vsel %vm66, %v56, 0
    %v74 = vsel %vm66, %v57, 0
    %v77 = vsel %vm66, %v58, 0
    %v80 = vsel %vm66, %v59, 0
    %v83 = vsel %vm66, %v60, 0
    %v86 = vsel %vm66, %v61, 0
    %88 = vmatpush.msra.mxu0 0.0
    %89 = vmatpush.msra.mxu0 0.0
    %90 = vmatpush.msra.mxu0 0.0
    %91 = vmatpush.msra.mxu0 0.0
    %92 = vmatpush.msra.mxu0 0.0
    %93 = vmatpush.msra.mxu0 0.0
    %94 = vmatpush.msra.mxu0 0.0
    %95 = vmatpush.msra.mxu0 0.0
    %96 = vmatpush.msra.mxu0 0.0
    %97 = vmatpush.msra.mxu0 0.0
    %98 = vmatpush.msra.mxu0 0.0
    %99 = vmatpush.msra.mxu0 0.0
    %100 = vmatpush.msra.mxu0 0.0
    %101 = vmatpush.msra.mxu0 0.0
    %102 = vmatpush.msra.mxu0 %v38
    %103 = vmatpush.msra.mxu0 %v37
    %104 = vmatmul.f32.gmra.mxu0 %v68
    %v105 = vpop.f32.mrf.mxu0
    %v106 = vadd.f32 %v64, %v105
    %107 = vmatmul.f32.gmra.mxu0 %v71
    %v108 = vpop.f32.mrf.mxu0
    %v109 = vadd.f32 %v64, %v108
    %110 = vmatmul.f32.gmra.mxu0 %v74
    %v111 = vpop.f32.mrf.mxu0
    %v112 = vadd.f32 %v64, %v111
    %113 = vmatmul.f32.gmra.mxu0 %v77
    %v114 = vpop.f32.mrf.mxu0
    %v115 = vadd.f32 %v64, %v114
    %116 = vmatmul.f32.gmra.mxu0 %v80
    %v117 = vpop.f32.mrf.mxu0
    %v118 = vadd.f32 %v64, %v117
    %119 = vmatmul.f32.gmra.mxu0 %v83
    %v120 = vpop.f32.mrf.mxu0
    %v121 = vadd.f32 %v64, %v120
    %122 = vmatmul.f32.gmra.mxu0 %v86
    %v123 = vpop.f32.mrf.mxu0
    %v124 = vadd.f32 %v64, %v123
    %125 = vdwg.mxu0
    %v126 = vxor.u32 %v106, 2147483648
    %v127 = vxor.u32 %v109, 2147483648
    %v128 = vxor.u32 %v112, 2147483648
    %v129 = vxor.u32 %v115, 2147483648
    %v130 = vxor.u32 %v118, 2147483648
    %v131 = vxor.u32 %v121, 2147483648
    %v132 = vxor.u32 %v124, 2147483648
    %v133 = vmul.f32 %v126, 1.442695
    %v134 = vpow.pop %v133
    %v135 = vmul.f32 %v127, 1.442695
    %v136 = vpow.pop %v135
    %v137 = vmul.f32 %v128, 1.442695
    %v138 = vpow.pop %v137
    %v139 = vmul.f32 %v129, 1.442695
    %v140 = vpow.pop %v139
    %v141 = vmul.f32 %v130, 1.442695
    %v142 = vpow.pop %v141
    %v143 = vmul.f32 %v131, 1.442695
    %v144 = vpow.pop %v143
    %v145 = vmul.f32 %v132, 1.442695
    %v146 = vpow.pop %v145
    %v147 = vadd.f32 %v134, 1.0
    %v148 = vadd.f32 %v136, 1.0
    %v149 = vadd.f32 %v138, 1.0
    %v150 = vadd.f32 %v140, 1.0
    %v151 = vadd.f32 %v142, 1.0
    %v152 = vadd.f32 %v144, 1.0
    %v153 = vadd.f32 %v146, 1.0
    %v154 = vrcp.pop %v147
    %v155 = vmul.f32 %v147, %v154
    %v156 = vsub.f32 1.0, %v155
    %v157 = vmul.f32 %v154, %v156
    %v158 = vadd.f32 %v154, %v157
    %vm159 = vweird.f32 %v147
    %vm160 = vweird.f32 %v154
    %vm161 = vmor %vm159, %vm160
    %v162 = vsel %vm161, %v154, %v158
    %v163 = vand.u32 2147483647, %v147
    %vm164 = vcmp.eq.f32.partialorder %v163, 8.507059e+37
    %v165 = vand.u32 %v147, 2147483648
    %v166 = vor.u32 1.1754944e-38, %v165
    %v167 = vsel %vm164, %v166, %v162
    %v168 = vmul.f32 1.0, %v167
    %v169 = vrcp.pop %v148
    %v170 = vmul.f32 %v148, %v169
    %v171 = vsub.f32 1.0, %v170
    %v172 = vmul.f32 %v169, %v171
    %v173 = vadd.f32 %v169, %v172
    %vm174 = vweird.f32 %v148
    %vm175 = vweird.f32 %v169
    %vm176 = vmor %vm174, %vm175
    %v177 = vsel %vm176, %v169, %v173
    %v178 = vand.u32 2147483647, %v148
    %vm179 = vcmp.eq.f32.partialorder %v178, 8.507059e+37
    %v180 = vand.u32 %v148, 2147483648
    %v181 = vor.u32 1.1754944e-38, %v180
    %v182 = vsel %vm179, %v181, %v177
    %v183 = vmul.f32 1.0, %v182
    %v184 = vrcp.pop %v149
    %v185 = vmul.f32 %v149, %v184
    %v186 = vsub.f32 1.0, %v185
    %v187 = vmul.f32 %v184, %v186
    %v188 = vadd.f32 %v184, %v187
    %vm189 = vweird.f32 %v149
    %vm190 = vweird.f32 %v184
    %vm191 = vmor %vm189, %vm190
    %v192 = vsel %vm191, %v184, %v188
    %v193 = vand.u32 2147483647, %v149
    %vm194 = vcmp.eq.f32.partialorder %v193, 8.507059e+37
    %v195 = vand.u32 %v149, 2147483648
    %v196 = vor.u32 1.1754944e-38, %v195
    %v197 = vsel %vm194, %v196, %v192
    %v198 = vmul.f32 1.0, %v197
    %v199 = vrcp.pop %v150
    %v200 = vmul.f32 %v150, %v199
    %v201 = vsub.f32 1.0, %v200
    %v202 = vmul.f32 %v199, %v201
    %v203 = vadd.f32 %v199, %v202
    %vm204 = vweird.f32 %v150
    %vm205 = vweird.f32 %v199
    %vm206 = vmor %vm204, %vm205
    %v207 = vsel %vm206, %v199, %v203
    %v208 = vand.u32 2147483647, %v150
    %vm209 = vcmp.eq.f32.partialorder %v208, 8.507059e+37
    %v210 = vand.u32 %v150, 2147483648
    %v211 = vor.u32 1.1754944e-38, %v210
    %v212 = vsel %vm209, %v211, %v207
    %v213 = vmul.f32 1.0, %v212
    %v214 = vrcp.pop %v151
    %v215 = vmul.f32 %v151, %v214
    %v216 = vsub.f32 1.0, %v215
    %v217 = vmul.f32 %v214, %v216
    %v218 = vadd.f32 %v214, %v217
    %vm219 = vweird.f32 %v151
    %vm220 = vweird.f32 %v214
    %vm221 = vmor %vm219, %vm220
    %v222 = vsel %vm221, %v214, %v218
    %v223 = vand.u32 2147483647, %v151
    %vm224 = vcmp.eq.f32.partialorder %v223, 8.507059e+37
    %v225 = vand.u32 %v151, 2147483648
    %v226 = vor.u32 1.1754944e-38, %v225
    %v227 = vsel %vm224, %v226, %v222
    %v228 = vmul.f32 1.0, %v227
    %v229 = vrcp.pop %v152
    %v230 = vmul.f32 %v152, %v229
    %v231 = vsub.f32 1.0, %v230
    %v232 = vmul.f32 %v229, %v231
    %v233 = vadd.f32 %v229, %v232
    %vm234 = vweird.f32 %v152
    %vm235 = vweird.f32 %v229
    %vm236 = vmor %vm234, %vm235
    %v237 = vsel %vm236, %v229, %v233
    %v238 = vand.u32 2147483647, %v152
    %vm239 = vcmp.eq.f32.partialorder %v238, 8.507059e+37
    %v240 = vand.u32 %v152, 2147483648
    %v241 = vor.u32 1.1754944e-38, %v240
    %v242 = vsel %vm239, %v241, %v237
    %v243 = vmul.f32 1.0, %v242
    %v244 = vrcp.pop %v153
    %v245 = vmul.f32 %v153, %v244
    %v246 = vsub.f32 1.0, %v245
    %v247 = vmul.f32 %v244, %v246
    %v248 = vadd.f32 %v244, %v247
    %vm249 = vweird.f32 %v153
    %vm250 = vweird.f32 %v244
    %vm251 = vmor %vm249, %vm250
    %v252 = vsel %vm251, %v244, %v248
    %v253 = vand.u32 2147483647, %v153
    %vm254 = vcmp.eq.f32.partialorder %v253, 8.507059e+37
    %v255 = vand.u32 %v153, 2147483648
    %v256 = vor.u32 1.1754944e-38, %v255
    %v257 = vsel %vm254, %v256, %v252
    %v258 = vmul.f32 1.0, %v257
    %v259 = vld [vmem:[%s4] sm:$0x1]
    %v261 = vperm.slane %v259, 0
    %263 = vmatpush.msra.mxu0 %v54
    %264 = vmatpush.msra.mxu0 %v53
    %265 = vmatpush.msra.mxu0 %v52
    %266 = vmatpush.msra.mxu0 %v51
    %267 = vmatpush.msra.mxu0 %v50
    %268 = vmatpush.msra.mxu0 %v49
    %269 = vmatpush.msra.mxu0 %v48
    %270 = vmatpush.msra.mxu0 %v47
    %271 = vmatpush.msra.mxu0 %v46
    %272 = vmatpush.msra.mxu0 %v45
    %273 = vmatpush.msra.mxu0 %v44
    %274 = vmatpush.msra.mxu0 %v43
    %275 = vmatpush.msra.mxu0 %v42
    %276 = vmatpush.msra.mxu0 %v41
    %277 = vmatpush.msra.mxu0 %v40
    %278 = vmatpush.msra.mxu0 %v39
    %279 = vmatmul.f32.gmra.mxu0 %v168
    %v280 = vpop.f32.mrf.mxu0
    %v281 = vadd.f32 %v261, %v280
    %282 = vmatmul.f32.gmra.mxu0 %v183
    %v283 = vpop.f32.mrf.mxu0
    %v284 = vadd.f32 %v261, %v283
    %285 = vmatmul.f32.gmra.mxu0 %v198
    %v286 = vpop.f32.mrf.mxu0
    %v287 = vadd.f32 %v261, %v286
    %288 = vmatmul.f32.gmra.mxu0 %v213
    %v289 = vpop.f32.mrf.mxu0
    %v290 = vadd.f32 %v261, %v289
    %291 = vmatmul.f32.gmra.mxu0 %v228
    %v292 = vpop.f32.mrf.mxu0
    %v293 = vadd.f32 %v261, %v292
    %294 = vmatmul.f32.gmra.mxu0 %v243
    %v295 = vpop.f32.mrf.mxu0
    %v296 = vadd.f32 %v261, %v295
    %297 = vmatmul.f32.gmra.mxu0 %v258
    %v298 = vpop.f32.mrf.mxu0
    %v299 = vadd.f32 %v261, %v298
    %300 = vdwg.mxu0
    %301 = vst [vmem:[#allocation5] sm:$0xff] %v281
    %302 = vst [vmem:[#allocation5 + $0x8] sm:$0xff] %v284
    %303 = vst [vmem:[#allocation5 + $0x10] sm:$0xff] %v287
    %304 = vst [vmem:[#allocation5 + $0x18] sm:$0xff] %v290
    %305 = vst [vmem:[#allocation5 + $0x20] sm:$0xff] %v293
    %306 = vst [vmem:[#allocation5 + $0x28] sm:$0xff] %v296
    %307 = vst [vmem:[#allocation5 + $0x30] sm:$0xff] %v299
    // Predicated region
    $region26: #{tpu_custom_call.1} parent=1 // pred_check
      _
    $region27: #{tpu_custom_call.1} parent=1 // pred_check_branch
      %309 = sbr.rel (0) target = $region29
    $region28: #{tpu_custom_call.1} parent=1 // pred_region
      %311 = vsyncadd [#allocation4], 0
      %s312 = sshll.u32 [#allocation5], 4
      %s313 = int_to_ptr.vmem [resolvable:$true] %s312
      %s314 = sshll.u32 %s5, 4
      %s315 = int_to_ptr.hbm [resolvable:$true] %s314
      %320 = dma.vmem_to_hbm [thread:$0]  %s313, 896, %s315, [#allocation4], 128, 128, 8
    $region29: #{tpu_custom_call.1} parent=1 // pred_fallthru
      _
    // Predicated region
    $region30: #{tpu_custom_call.1} parent=1 // pred_check
      _
    $region31: #{tpu_custom_call.1} parent=1 // pred_check_branch
      %322 = sbr.rel (0) target = $region33
    $region32: #{tpu_custom_call.1} parent=1 // pred_region
      %324 = dma.done [#allocation4], 896
    $region33: #{tpu_custom_call.1} parent=1 // pred_fallthru
      _
    %325 = vsyncpa [#allocation3], 1
    %326 = vsyncpa [#allocation4], 1

</llo_original>
